<compile_context>
chip_gen: v6e
topology: v6e:2x2x1
jax: 0.10.0
libtpu: 0.0.40
codegen_flags: <defaults>
</compile_context>

<pallas_src>
import functools

import jax
import jax.numpy as jnp
from jax.experimental import pallas as pl
from jax.experimental.pallas import tpu as pltpu

BN_EPS = 1e-5
LANE = 128


def _round_up(x, m):
    return (x + m - 1) // m * m


def _compiler_params():
    return pltpu.CompilerParams(
        dimension_semantics=("parallel",),
        vmem_limit_bytes=32 * 1024 * 1024,
    )


# --------------------------------------------------------------------------
# Pallas kernels
# --------------------------------------------------------------------------
def _matmul_stats_kernel(p_ref, w_ref, y_ref, s_ref):
    """One row-tile of conv-as-matmul (bf16 in, f32 acc) + per-tile channel stats."""
    y = jnp.dot(p_ref[...], w_ref[...], preferred_element_type=jnp.float32)
    y_ref[...] = y
    # per-tile partial sums for the cross-tile BatchNorm reduction
    s_ref[0:1, :] = jnp.sum(y, axis=0, keepdims=True)
    s_ref[1:2, :] = jnp.sum(y * y, axis=0, keepdims=True)


def _bn_act_kernel(y_ref, scale_ref, shift_ref, o_ref, *, relu):
    """Folded BatchNorm epilogue: one fused multiply-add (+ optional ReLU)."""
    out = y_ref[...] * scale_ref[...] + shift_ref[...]
    if relu:
        out = jnp.maximum(out, 0.0)
    o_ref[...] = out


def _bn_add_relu_kernel(y_ref, sc_ref, scl1_ref, sh1_ref, scl2_ref, sh2_ref, o_ref):
    """Fused: BN(conv2) + BN(shortcut) (or identity) + residual add + ReLU."""
    a = y_ref[...] * scl1_ref[...] + sh1_ref[...]
    b = sc_ref[...] * scl2_ref[...] + sh2_ref[...]
    o_ref[...] = jnp.maximum(a + b, 0.0)


# --------------------------------------------------------------------------
# pallas_call wrappers
# --------------------------------------------------------------------------
def _matmul_stats(patches_bf16, w_bf16, tm):
    m, k = patches_bf16.shape
    c = w_bf16.shape[1]
    nm = m // tm
    y, stats = pl.pallas_call(
        _matmul_stats_kernel,
        grid=(nm,),
        in_specs=[
            pl.BlockSpec((tm, k), lambda i: (i, 0)),      # row-tiled patches
            pl.BlockSpec((k, c), lambda i: (0, 0)),       # weights resident
        ],
        out_specs=[
            pl.BlockSpec((tm, c), lambda i: (i, 0)),       # lane-dense conv out
            pl.BlockSpec((None, 2, c), lambda i: (i, 0, 0)),  # per-tile sum/sumsq
        ],
        out_shape=[
            jax.ShapeDtypeStruct((m, c), jnp.float32),
            jax.ShapeDtypeStruct((nm, 2, c), jnp.float32),
        ],
        compiler_params=_compiler_params(),
    )(patches_bf16, w_bf16)
    return y, stats


def _bn_act(y, scale, shift, tm, relu):
    m, c = y.shape
    nm = m // tm
    tile = pl.BlockSpec((tm, c), lambda i: (i, 0))
    vec = pl.BlockSpec((1, c), lambda i: (0, 0))
    return pl.pallas_call(
        functools.partial(_bn_act_kernel, relu=relu),
        grid=(nm,),
        in_specs=[tile, vec, vec],
        out_specs=tile,
        out_shape=jax.ShapeDtypeStruct((m, c), jnp.float32),
        compiler_params=_compiler_params(),
    )(y, scale, shift)


def _bn_add_relu(y, sc, scale1, shift1, scale2, shift2, tm):
    m, c = y.shape
    nm = m // tm
    tile = pl.BlockSpec((tm, c), lambda i: (i, 0))
    vec = pl.BlockSpec((1, c), lambda i: (0, 0))
    return pl.pallas_call(
        _bn_add_relu_kernel,
        grid=(nm,),
        in_specs=[tile, tile, vec, vec, vec, vec],
        out_specs=tile,
        out_shape=jax.ShapeDtypeStruct((m, c), jnp.float32),
        compiler_params=_compiler_params(),
    )(y, sc, scale1, shift1, scale2, shift2)


# --------------------------------------------------------------------------
# Host-side glue: NHWC im2col, padding, BN finalize (tiny per-channel math)
# --------------------------------------------------------------------------
def _im2col_nhwc(x_nhwc, kh, kw, stride, pad):
    n, h, w, c = x_nhwc.shape
    xp = jnp.pad(x_nhwc, ((0, 0), (pad, pad), (pad, pad), (0, 0)))
    ho = (h + 2 * pad - kh) // stride + 1
    wo = (w + 2 * pad - kw) // stride + 1
    taps = []
    for i in range(kh):
        for j in range(kw):
            taps.append(xp[:, i:i + stride * ho:stride, j:j + stride * wo:stride, :])
    # (kh*kw, N, Ho, Wo, C) -> (N, Ho, Wo, C, kh*kw) -> (M, C*kh*kw)
    p = jnp.stack(taps, axis=0).transpose(1, 2, 3, 4, 0)
    return p.reshape(n * ho * wo, c * kh * kw), ho, wo


def _pad_rows(a, m_pad):
    m = a.shape[0]
    return a if m_pad == m else jnp.pad(a, ((0, m_pad - m), (0, 0)))


def _prep_weight(w, c_pad):
    """(Cout, Cin, kh, kw) -> (Cin*kh*kw, Cpad) bf16, zero-padded output channels."""
    cout = w.shape[0]
    w2d = w.reshape(cout, -1).T.astype(jnp.float32)
    k = w2d.shape[0]
    wp = jnp.zeros((k, c_pad), jnp.float32).at[:, :cout].set(w2d)
    return wp.astype(jnp.bfloat16)


def _scale_shift(stats, gamma, beta, m_real, c_out, c_pad):
    """Finalize BN batch stats into one fused per-channel (scale, shift)."""
    s = stats.sum(axis=0)                                  # (2, Cpad)
    mean = s[0] / m_real
    var = jnp.maximum(s[1] / m_real - mean * mean, 0.0)    # biased variance
    g = jnp.zeros((c_pad,), jnp.float32).at[:c_out].set(gamma.astype(jnp.float32))
    b = jnp.zeros((c_pad,), jnp.float32).at[:c_out].set(beta.astype(jnp.float32))
    scale = g * jax.lax.rsqrt(var + BN_EPS)
    shift = b - mean * scale
    return scale.reshape(1, c_pad), shift.reshape(1, c_pad)


# --------------------------------------------------------------------------
# BasicBlock forward
# --------------------------------------------------------------------------
def basic_block_forward(x_nchw, params, stride, *, block_rows=512):
    """x_nchw: NCHW float32. Returns NCHW float32 (training-mode BatchNorm)."""
    n, cin, h, w = x_nchw.shape
    w1, g1, be1 = params["w1"], params["g1"], params["be1"]
    w2, g2, be2 = params["w2"], params["g2"], params["be2"]
    # NOTE: params["b1"] (conv1 bias) is intentionally unused - it cancels exactly
    # under training-mode BatchNorm.
    cout = w1.shape[0]
    c_pad = _round_up(cout, LANE)

    x = x_nchw.transpose(0, 2, 3, 1).astype(jnp.float32)   # single NCHW -> NHWC

    ho = (h + 2 - 3) // stride + 1
    wo = (w + 2 - 3) // stride + 1
    m_real = n * ho * wo
    tm = min(_round_up(block_rows, 16), _round_up(m_real, 16))
    m_pad = _round_up(m_real, tm)

    # ---- conv1 (3x3, stride) + BN1 + ReLU ----------------------------------
    p1, _, _ = _im2col_nhwc(x, 3, 3, stride, 1)
    p1 = _pad_rows(p1, m_pad).astype(jnp.bfloat16)
    y1_raw, st1 = _matmul_stats(p1, _prep_weight(w1, c_pad), tm)
    scl1, sh1 = _scale_shift(st1, g1, be1, m_real, cout, c_pad)
    y1 = _bn_act(y1_raw, scl1, sh1, tm, relu=True)          # (m_pad, c_pad) f32

    # ---- conv2 (3x3, stride 1) — BN2 is fused into the final add kernel ----
    y1_img = y1[:m_real, :cout].reshape(n, ho, wo, cout)     # stays NHWC
    p2, _, _ = _im2col_nhwc(y1_img, 3, 3, 1, 1)
    p2 = _pad_rows(p2, m_pad).astype(jnp.bfloat16)
    y2_raw, st2 = _matmul_stats(p2, _prep_weight(w2, c_pad), tm)
    scl2, sh2 = _scale_shift(st2, g2, be2, m_real, cout, c_pad)

    # ---- shortcut branch ----------------------------------------------------
    if stride != 1 or cin != cout:
        ws, gs, bes = params["ws"], params["gs"], params["bes"]
        # 1x1 stride-s conv: the "im2col" is just a strided spatial slice.
        ps = x[:, ::stride, ::stride, :].reshape(m_real, cin)
        ps = _pad_rows(ps, m_pad).astype(jnp.bfloat16)
        s_raw, sts = _matmul_stats(ps, _prep_weight(ws, c_pad), tm)
        scl_s, sh_s = _scale_shift(sts, gs, bes, m_real, cout, c_pad)
    else:
        s_flat = x.reshape(m_real, cin)                      # identity, already NHWC
        s_raw = _pad_rows(jnp.pad(s_flat, ((0, 0), (0, c_pad - cin))), m_pad)
        scl_s = jnp.ones((1, c_pad), jnp.float32)
        sh_s = jnp.zeros((1, c_pad), jnp.float32)

    # ---- fused BN2 + BN(shortcut) + residual add + ReLU ---------------------
    out = _bn_add_relu(y2_raw, s_raw, scl2, sh2, scl_s, sh_s, tm)
    out = out[:m_real, :cout].reshape(n, ho, wo, cout).transpose(0, 3, 1, 2)
    return out


# --------------------------------------------------------------------------
# Pure-JAX reference (training-mode BN; inputs rounded to bf16 like the kernel)
# --------------------------------------------------------------------------
def _bf16_round(a):
    return a.astype(jnp.bfloat16).astype(jnp.float32)


def _ref_conv(x, w, b, stride, pad):
    y = jax.lax.conv_general_dilated(
        _bf16_round(x), _bf16_round(w), (stride, stride),
        [(pad, pad), (pad, pad)],
        dimension_numbers=("NCHW", "OIHW", "NCHW"))
    if b is not None:
        y = y + b.reshape(1, -1, 1, 1)   # kept here to show it cancels in BN
    return y


def _ref_bn(x, g, be):
    mean = x.mean(axis=(0, 2, 3), keepdims=True)
    var = jnp.square(x - mean).mean(axis=(0, 2, 3), keepdims=True)
    return (x - mean) * jax.lax.rsqrt(var + BN_EPS) * g.reshape(1, -1, 1, 1) \
        + be.reshape(1, -1, 1, 1)


def basic_block_reference(x, params, stride):
    cin = x.shape[1]
    cout = params["w1"].shape[0]
    y = jax.nn.relu(_ref_bn(_ref_conv(x, params["w1"], params["b1"], stride, 1),
                            params["g1"], params["be1"]))
    y = _ref_bn(_ref_conv(y, params["w2"], None, 1, 1), params["g2"], params["be2"])
    if stride != 1 or cin != cout:
        sc = _ref_bn(_ref_conv(x, params["ws"], None, stride, 0),
                     params["gs"], params["bes"])
    else:
        sc = x
    return jax.nn.relu(y + sc)


# --------------------------------------------------------------------------
if __name__ == "__main__":
    def run_case(key, n, cin, h, w, cout, stride, block_rows):
        ks = jax.random.split(key, 12)

        def uni(k, shape, fan_in):
            bound = 1.0 / jnp.sqrt(jnp.float32(fan_in))
            return jax.random.uniform(k, shape, jnp.float32, -bound, bound)

        params = {
            "w1": uni(ks[0], (cout, cin, 3, 3), cin * 9),
            "b1": uni(ks[1], (cout,), cin * 9),
            "g1": 1.0 + 0.1 * jax.random.normal(ks[2], (cout,), jnp.float32),
            "be1": 0.1 * jax.random.normal(ks[3], (cout,), jnp.float32),
            "w2": uni(ks[4], (cout, cout, 3, 3), cout * 9),
            "g2": 1.0 + 0.1 * jax.random.normal(ks[5], (cout,), jnp.float32),
            "be2": 0.1 * jax.random.normal(ks[6], (cout,), jnp.float32),
        }
        if stride != 1 or cin != cout:
            params.update({
                "ws": uni(ks[7], (cout, cin, 1, 1), cin),
                "gs": 1.0 + 0.1 * jax.random.normal(ks[8], (cout,), jnp.float32),
                "bes": 0.1 * jax.random.normal(ks[9], (cout,), jnp.float32),
            })

        x = jax.random.normal(ks[10], (n, cin, h, w), jnp.float32)

        out = jax.block_until_ready(
            basic_block_forward(x, params, stride, block_rows=block_rows))
        ref = jax.block_until_ready(basic_block_reference(x, params, stride))

        ho = (h + 2 - 3) // stride + 1
        wo = (w + 2 - 3) // stride + 1
        assert out.shape == (n, cout, ho, wo), out.shape
        err = float(jnp.max(jnp.abs(out - ref)))
        assert jnp.allclose(out, ref, atol=1e-2, rtol=1e-2), err
        return err

    key = jax.random.PRNGKey(0)
    k1, k2 = jax.random.split(key)
    # downsampling block (conv shortcut); small row-tiles -> multi-tile grid
    # with a partial (zero-padded) last tile, exercising the cross-tile BN path.
    run_case(k1, 2, 4, 16, 16, 8, 2, block_rows=48)
    # identity-shortcut block; 4 row-tiles, stride 1.
    run_case(k2, 2, 8, 16, 16, 8, 1, block_rows=128)
    print("KERNEL_OK")
</pallas_src>

<mosaic_0001>
module attributes {stable_mosaic.version = 11 : i64} {
  func.func @_matmul_stats_kernel(%arg0: i32, %arg1: memref<48x36xbf16, #tpu.memory_space<vmem>>, %arg2: memref<36x128xbf16, #tpu.memory_space<vmem>>, %arg3: memref<48x128xf32, #tpu.memory_space<vmem>>, %arg4: memref<1x2x128xf32, #tpu.memory_space<vmem>>) attributes {dimension_semantics = [#tpu.dimension_semantics<parallel>], iteration_bounds = array<i64: 3>, scalar_prefetch = 0 : i64, scratch_operands = 0 : i64, tpu.core_type = #tpu.core_type<tc>, window_params = [{transform_indices = @transform_0, window_bounds = array<i64: 48, 36>}, {pipeline_mode = #tpu.pipeline_mode<synchronous>, transform_indices = @transform_1, window_bounds = array<i64: 36, 128>}, {transform_indices = @transform_2, window_bounds = array<i64: 48, 128>}, {transform_indices = @transform_3, window_bounds = array<i64: 1, 2, 128>}]} {
    %c0 = arith.constant 0 : index
    %c0_0 = arith.constant 0 : index
    %0 = vector.load %arg1[%c0, %c0_0] : memref<48x36xbf16, #tpu.memory_space<vmem>>, vector<48x36xbf16>
    %c0_1 = arith.constant 0 : index
    %c0_2 = arith.constant 0 : index
    %1 = vector.load %arg2[%c0_1, %c0_2] : memref<36x128xbf16, #tpu.memory_space<vmem>>, vector<36x128xbf16>
    %cst = arith.constant dense<0.000000e+00> : vector<48x128xf32>
    %2 = tpu.matmul %0, %1, %cst {dimension_numbers = #tpu.dot_dimension_numbers<[1], [0], [0], [1], [0, 0, 1, 1], [], []>} : vector<48x36xbf16>, vector<36x128xbf16>, vector<48x128xf32> -> vector<48x128xf32>
    %c0_3 = arith.constant 0 : index
    %c0_4 = arith.constant 0 : index
    %3 = vector.load %arg3[%c0_3, %c0_4] : memref<48x128xf32, #tpu.memory_space<vmem>>, vector<48x128xf32>
    tpu.vector_store %arg3[%c0_3, %c0_4], %2 {strides = array<i32>} : memref<48x128xf32, #tpu.memory_space<vmem>>, vector<48x128xf32>,
    %cst_5 = arith.constant dense<0.000000e+00> : vector<128xf32>
    %4 = vector.multi_reduction <add>, %2, %cst_5 [0] : vector<48x128xf32> to vector<128xf32>
    %5 = vector.shape_cast %4 : vector<128xf32> to vector<1x128xf32>
    %c0_6 = arith.constant 0 : index
    %c0_7 = arith.constant 0 : index
    %c0_8 = arith.constant 0 : index
    %6 = vector.load %arg4[%c0_6, %c0_7, %c0_8] : memref<1x2x128xf32, #tpu.memory_space<vmem>>, vector<1x1x128xf32>
    %7 = vector.shape_cast %6 : vector<1x1x128xf32> to vector<1x128xf32>
    %8 = vector.shape_cast %5 : vector<1x128xf32> to vector<1x1x128xf32>
    tpu.vector_store %arg4[%c0_6, %c0_7, %c0_8], %8 {strides = array<i32>} : memref<1x2x128xf32, #tpu.memory_space<vmem>>, vector<1x1x128xf32>,
    %9 = arith.mulf %2, %2 : vector<48x128xf32>
    %cst_9 = arith.constant dense<0.000000e+00> : vector<128xf32>
    %10 = vector.multi_reduction <add>, %9, %cst_9 [0] : vector<48x128xf32> to vector<128xf32>
    %11 = vector.shape_cast %10 : vector<128xf32> to vector<1x128xf32>
    %c0_10 = arith.constant 0 : index
    %c1 = arith.constant 1 : index
    %c0_11 = arith.constant 0 : index
    %12 = vector.load %arg4[%c0_10, %c1, %c0_11] : memref<1x2x128xf32, #tpu.memory_space<vmem>>, vector<1x1x128xf32>
    %13 = vector.shape_cast %12 : vector<1x1x128xf32> to vector<1x128xf32>
    %14 = vector.shape_cast %11 : vector<1x128xf32> to vector<1x1x128xf32>
    tpu.vector_store %arg4[%c0_10, %c1, %c0_11], %14 {strides = array<i32>} : memref<1x2x128xf32, #tpu.memory_space<vmem>>, vector<1x1x128xf32>,
    return
  }
  func.func @transform_0(%arg0: i32) -> (i32, i32) {
    %c0_i32 = arith.constant 0 : i32
    %c0_i32_0 = arith.constant 0 : i32
    return %arg0, %c0_i32 : i32, i32
  }
  func.func @transform_1(%arg0: i32) -> (i32, i32) {
    %c0_i32 = arith.constant 0 : i32
    %c0_i32_0 = arith.constant 0 : i32
    %c0_i32_1 = arith.constant 0 : i32
    return %c0_i32, %c0_i32_0 : i32, i32
  }
  func.func @transform_2(%arg0: i32) -> (i32, i32) {
    %c0_i32 = arith.constant 0 : i32
    %c0_i32_0 = arith.constant 0 : i32
    return %arg0, %c0_i32 : i32, i32
  }
  func.func @transform_3(%arg0: i32) -> (i32, i32, i32) {
    %c0_i32 = arith.constant 0 : i32
    %c0_i32_0 = arith.constant 0 : i32
    %c0_i32_1 = arith.constant 0 : i32
    return %arg0, %c0_i32, %c0_i32_0 : i32, i32, i32
  }
}

</mosaic_0001>

<llo_original>
// kernel: tpu_custom_call.1
$region0: #{tpu_custom_call.1}
  #allocation0 [shape = 'u32[]', space=smem, size = 0x4, offset = 0x4, fixed_abs, tag = 'smem constant byte address 0x4 - core index']
  #allocation1 [shape = 'u32[144,128]{1,0:T(1,128)}', space=vmem, size = 0x12000, scoped, tag = 'internal scratch']
  %s0 = inlined_call_operand.vmem [shape: bf16[144,36], index: 0, kind: input, shape index: {}]
  %s1 = inlined_call_operand.vmem [shape: bf16[36,128], index: 1, kind: input, shape index: {}]
  %s2 = inlined_call_operand.hbm [shape: f32[144,128], index: 2, kind: output, shape index: {0}]
  %s3 = inlined_call_operand.hbm [shape: f32[3,2,128], index: 3, kind: output, shape index: {1}]
  %4 = xla_tuple %s2, %s3
  %s5 = sld [smem:[#allocation0]]
  $region49: #{tpu_custom_call.1} parent=0
    _
  %s7 = ssub.s32 1, %s5
  %s8 = scalar_select 0, %s7, %s5
  $region1: #{tpu_custom_call.1} parent=0
    #allocation2 [shape = 'u8[49152]{0}', space=vmem, size = 0xc000, scoped, tag = 'output window, operand 0']
    #allocation3 [shape = 's32[2]{0}', space=sflag, size = 0x8, scoped, tag = 'scoped memory for tpu_custom_call.1']
    #allocation4 [shape = 'u8[2048]{0}', space=vmem, size = 0x800, scoped, tag = 'output window, operand 1']
    #allocation5 [shape = 's32[2]{0}', space=sflag, size = 0x8, scoped, tag = 'scoped memory for tpu_custom_call.1']
    %9 = vsyncpa [#allocation3], 0
    %s10 = scalar_lea.sflag [#allocation3], 1
    %11 = vsyncpa %s10, 0
    %12 = vsyncpa [#allocation5], 0
    %s13 = scalar_lea.sflag [#allocation5], 1
    %14 = vsyncpa %s13, 0
    loop: start=0, step=1, limit=5
    $region2: #{tpu_custom_call.1} parent=1 // loop_pre_header
      _
    $region3: #{tpu_custom_call.1} parent=1 // loop_header
      %s16 = sphi 0, %s20
      %p17 = scmp.ge.s32.totalorder %s16, 5
      %s26 = sphi 0, %s28
      %s29 = sphi 0, %s26
      %s30 = sphi 0, %s29
      %s46 = sphi 0, %s30
      %s50 = sphi 0, %s50
      %s52 = sphi 0, %s50
      %s53 = sphi 0, %s52
      %s67 = sphi 0, %s53
      %s73 = sphi 0, %s75
      %s76 = sphi 0, %s73
      %s77 = sphi 0, %s76
      %s93 = sphi 0, %s77
      %s99 = sphi 0, %s101
      %s102 = sphi 0, %s99
      %s103 = sphi 0, %s102
      %s119 = sphi 0, %s103
    $region4: #{tpu_custom_call.1} parent=1 // loop_header_branch
      %19 = sbr.rel (%p17) target = $region8
    $region5: #{tpu_custom_call.1} parent=1 // loop_body
      %s21 = ssub.s32 %s16, 1
      %s22 = ssub.s32 %s16, 2
      %s23 = sadd.s32 %s16, 1
      %s24 = ssub.s32 %s16, %s23
      %p25 = scmp.eq.s32.totalorder %s24, 0
      %s27 = sadd.s32 %s26, 1
      %s28 = scalar_select %p25, %s26, %s27
      %p31 = pneg %p25
      %p32 = scmp.eq.s32.totalorder %s16, 2
      %p33 = por %p31, %p32
      %p34 = scmp.ne.s32.totalorder %s26, %s29
      %p35 = scmp.eq.s32.totalorder %s16, 0
      %p36 = por %p34, %p35
      %p37 = scmp.ne.s32.totalorder %s26, %s29
      %p38 = scmp.eq.s32.totalorder %s21, 2
      %p39 = por %p37, %p38
      %p40 = scmp.ne.s32.totalorder %s29, %s30
      %p41 = scmp.eq.s32.totalorder %s21, 0
      %p42 = por %p40, %p41
      %p43 = scmp.ne.s32.totalorder %s29, %s30
      %p44 = scmp.eq.s32.totalorder %s22, 2
      %p45 = por %p43, %p44
      %p47 = scmp.ne.s32.totalorder %s30, %s46
      %p48 = scmp.eq.s32.totalorder %s22, 0
      %p49 = por %p47, %p48
      %s51 = sadd.s32 %s50, 1
      %p54 = scmp.eq.s32.totalorder %s16, 2
      %p55 = scmp.ne.s32.totalorder %s50, %s52
      %p56 = scmp.eq.s32.totalorder %s16, 0
      %p57 = por %p55, %p56
      %p58 = scmp.ne.s32.totalorder %s50, %s52
      %p59 = scmp.eq.s32.totalorder %s21, 2
      %p60 = por %p58, %p59
      %p61 = scmp.ne.s32.totalorder %s52, %s53
      %p62 = scmp.eq.s32.totalorder %s21, 0
      %p63 = por %p61, %p62
      %p64 = scmp.ne.s32.totalorder %s52, %s53
      %p65 = scmp.eq.s32.totalorder %s22, 2
      %p66 = por %p64, %p65
      %p68 = scmp.ne.s32.totalorder %s53, %s67
      %p69 = scmp.eq.s32.totalorder %s22, 0
      %p70 = por %p68, %p69
      %s71 = ssub.s32 %s16, %s23
      %p72 = scmp.eq.s32.totalorder %s71, 0
      %s74 = sadd.s32 %s73, 1
      %s75 = scalar_select %p72, %s73, %s74
      %p78 = pneg %p72
      %p79 = scmp.eq.s32.totalorder %s16, 2
      %p80 = por %p78, %p79
      %p81 = scmp.ne.s32.totalorder %s73, %s76
      %p82 = scmp.eq.s32.totalorder %s16, 0
      %p83 = por %p81, %p82
      %p84 = scmp.ne.s32.totalorder %s73, %s76
      %p85 = scmp.eq.s32.totalorder %s21, 2
      %p86 = por %p84, %p85
      %p87 = scmp.ne.s32.totalorder %s76, %s77
      %p88 = scmp.eq.s32.totalorder %s21, 0
      %p89 = por %p87, %p88
      %p90 = scmp.ne.s32.totalorder %s76, %s77
      %p91 = scmp.eq.s32.totalorder %s22, 2
      %p92 = por %p90, %p91
      %p94 = scmp.ne.s32.totalorder %s77, %s93
      %p95 = scmp.eq.s32.totalorder %s22, 0
      %p96 = por %p94, %p95
      %s97 = ssub.s32 %s16, %s23
      %p98 = scmp.eq.s32.totalorder %s97, 0
      %s100 = sadd.s32 %s99, 1
      %s101 = scalar_select %p98, %s99, %s100
      %p104 = pneg %p98
      %p105 = scmp.eq.s32.totalorder %s16, 2
      %p106 = por %p104, %p105
      %p107 = scmp.ne.s32.totalorder %s99, %s102
      %p108 = scmp.eq.s32.totalorder %s16, 0
      %p109 = por %p107, %p108
      %p110 = scmp.ne.s32.totalorder %s99, %s102
      %p111 = scmp.eq.s32.totalorder %s21, 2
      %p112 = por %p110, %p111
      %p113 = scmp.ne.s32.totalorder %s102, %s103
      %p114 = scmp.eq.s32.totalorder %s21, 0
      %p115 = por %p113, %p114
      %p116 = scmp.ne.s32.totalorder %s102, %s103
      %p117 = scmp.eq.s32.totalorder %s22, 2
      %p118 = por %p116, %p117
      %p120 = scmp.ne.s32.totalorder %s103, %s119
      %p121 = scmp.eq.s32.totalorder %s22, 0
      %p122 = por %p120, %p121
      %p123 = scmp.le.s32.totalorder 1, %s16
      %p124 = scmp.lt.s32.totalorder %s16, 4
      %p125 = pnand %p123, %p124
      %p126 = pneg %p125
      // Predicated region
      $region9: #{tpu_custom_call.1} parent=5 // pred_check
        _
      $region10: #{tpu_custom_call.1} parent=5 // pred_check_branch
        %128 = sbr.rel (%p125) target = $region12
      $region11: #{tpu_custom_call.1} parent=5 // pred_region
        %s129 = ssub.s32 %s16, 1
        // Predicated region
        $region13: #{tpu_custom_call.1} parent=11 // pred_check
          %p130 = pneg %p63
        $region14: #{tpu_custom_call.1} parent=11 // pred_check_branch
          %132 = sbr.rel (%p130) target = $region16
        $region15: #{tpu_custom_call.1} parent=11 // pred_region
          _
        $region16: #{tpu_custom_call.1} parent=11 // pred_fallthru
          _
      $region12: #{tpu_custom_call.1} parent=5 // pred_fallthru
        _
      %p133 = scmp.lt.s32.totalorder %s16, 3
      // Predicated region
      $region17: #{tpu_custom_call.1} parent=5 // pred_check
        %p134 = pneg %p133
      $region18: #{tpu_custom_call.1} parent=5 // pred_check_branch
        %136 = sbr.rel (%p134) target = $region20
      $region19: #{tpu_custom_call.1} parent=5 // pred_region
        // Predicated region
        $region21: #{tpu_custom_call.1} parent=19 // pred_check
          %p137 = pneg %p36
        $region22: #{tpu_custom_call.1} parent=19 // pred_check_branch
          %139 = sbr.rel (%p137) target = $region24
        $region23: #{tpu_custom_call.1} parent=19 // pred_region
          %s140 = smul.u32 6, %s16
          %p141 = scmp.lt.s32.totalorder %s140, 17
          %s142 = scalar_select %p141, %s140, 17
          %s143 = smul.addr %s142, 4
          %s144 = scalar_lea.vmem %s0, %s143
          %s145 = smul.u32 6, %s16
        $region24: #{tpu_custom_call.1} parent=19 // pred_fallthru
          _
      $region20: #{tpu_custom_call.1} parent=5 // pred_fallthru
        _
      %p146 = scmp.le.s32.totalorder 1, %s16
      %p147 = scmp.lt.s32.totalorder %s16, 4
      %p148 = pnand %p146, %p147
      %p149 = pneg %p148
      // Predicated region
      $region25: #{tpu_custom_call.1} parent=5 // pred_check
        _
      $region26: #{tpu_custom_call.1} parent=5 // pred_check_branch
        %151 = sbr.rel (%p148) target = $region28
      $region27: #{tpu_custom_call.1} parent=5 // pred_region
        %s152 = ssub.s32 %s16, 1
        %s153 = smul.u32 6, %s21
        %p154 = scmp.lt.s32.totalorder %s153, 17
        %s155 = scalar_select %p154, %s153, 17
        %s156 = smul.addr %s155, 4
        %s157 = scalar_lea.vmem %s0, %s156
        %p158 = pneg %p42
        %p159 = pneg %p39
        %p160 = pneg %p63
        %p161 = pneg %p60
        %p162 = pneg %p89
        %p163 = pneg %p86
        %s164 = sand.u32 %s76, 1
        %s165 = scalar_lea.sflag [#allocation3], %s164
        %s166 = sand.u32 %s76, 1
        %s167 = smul.addr %s166, 48
        %s168 = scalar_lea.vmem [#allocation2], %s167
        %p169 = pneg %p115
        %p170 = pneg %p112
        %s171 = sand.u32 %s102, 1
        %s172 = scalar_lea.sflag [#allocation5], %s171
        %s173 = sand.u32 %s102, 1
        %s174 = smul.addr %s173, 2
        %s175 = scalar_lea.vmem [#allocation4], %s174
        %s176 = smul.u32 6, %s21
        %p177 = scmp.lt.s32.totalorder %s176, 17
        %s178 = scalar_select %p177, %s176, 17
        %s179 = smul.addr %s178, 4
        %s180 = scalar_lea.vmem %s0, %s179
        %s181 = smul.u32 6, %s21
        %s182 = smul.u32 6, %s21
        %v184 = vld [vmem:[%s180] sm:$0xf]
        %v185 = vld [vmem:[%s180 + $0x4] sm:$0xf]
        %v186 = vld [vmem:[%s180 + $0x8] sm:$0xf]
        %v187 = vld [vmem:[%s180 + $0xc] sm:$0xf]
        %v188 = vld [vmem:[%s180 + $0x10] sm:$0xf]
        %v189 = vld [vmem:[%s180 + $0x14] sm:$0xf]
        %v190 = vld [vmem:[%s1] sm:$0xf]
        %v191 = vld [vmem:[%s1 + $0x4] sm:$0xf]
        %v192 = vld [vmem:[%s1 + $0x8] sm:$0xf]
        %v193 = vld [vmem:[%s1 + $0xc] sm:$0xf]
        %v194 = vld [vmem:[%s1 + $0x10] sm:$0x3]
        %v201 = vunpack.c.l.b16 %v184
        %v202 = vunpack.c.l.b16 %v185
        %v203 = vunpack.c.l.b16 %v186
        %v204 = vunpack.c.l.b16 %v187
        %v205 = vunpack.c.l.b16 %v188
        %v206 = vunpack.c.l.b16 %v189
        %v207 = vpack.c.b16 %v202, %v201
        %v208 = vpack.c.b16 %v204, %v203
        %v209 = vpack.c.b16 %v206, %v205
        %v215 = vunpack.c.l.b16 %v190
        %v216 = vunpack.c.l.b16 %v191
        %v217 = vunpack.c.l.b16 %v192
        %v218 = vunpack.c.l.b16 %v193
        %v219 = vunpack.c.l.b16 %v194
        %v220 = vpack.c.b16 %v216, %v215
        %v221 = vpack.c.b16 %v218, %v217
        %v222 = vpack.c.b16 %v219, %v219
        %vm225 = vcmask 293888
        %v227 = vsel %vm225, %v207, 0
        %v230 = vsel %vm225, %v208, 0
        %v233 = vsel %vm225, %v209, 0
        %vm235 = vcmask 1041408
        %v237 = vsel %vm235, %v222, 0
        %239 = vmatprep.subr.bf16.mxu0 0
        %240 = vmatpush1.bf16.msra.mxu0 0
        %241 = vmatprep.subr.bf16.mxu0 0
        %242 = vmatpush1.bf16.msra.mxu0 0
        %243 = vmatprep.subr.bf16.mxu0 0
        %244 = vmatpush1.bf16.msra.mxu0 0
        %245 = vmatprep.subr.bf16.mxu0 0
        %246 = vmatpush1.bf16.msra.mxu0 0
        %247 = vmatprep.subr.bf16.mxu0 0
        %248 = vmatpush1.bf16.msra.mxu0 0
        %249 = vmatprep.subr.bf16.mxu0 0
        %250 = vmatpush1.bf16.msra.mxu0 %v237
        %251 = vmatprep.subr.bf16.mxu0 0
        %252 = vmatpush1.bf16.msra.mxu0 %v221
        %253 = vmatprep.subr.bf16.mxu0 0
        %254 = vmatpush1.bf16.msra.mxu0 %v220
        %255 = vmatprep.subr.bf16.mxu0 0
        %256 = vmatpush2.bf16.msra.mxu0 0
        %257 = vmatprep.subr.bf16.mxu0 0
        %258 = vmatpush2.bf16.msra.mxu0 0
        %259 = vmatprep.subr.bf16.mxu0 0
        %260 = vmatpush2.bf16.msra.mxu0 0
        %261 = vmatprep.subr.bf16.mxu0 0
        %262 = vmatpush2.bf16.msra.mxu0 0
        %263 = vmatprep.subr.bf16.mxu0 0
        %264 = vmatpush2.bf16.msra.mxu0 0
        %265 = vmatprep.subr.bf16.mxu0 0
        %266 = vmatpush2.bf16.msra.mxu0 0
        %267 = vmatprep.subr.bf16.mxu0 0
        %268 = vmatpush2.bf16.msra.mxu0 0
        %269 = vmatprep.subr.bf16.mxu0 0
        %270 = vmatpush2.bf16.msra.mxu0 0
        %271 = vmatprep.mubr.bf16.mxu0 0
        %272 = vmatmul.mubr.bf16.gmra.mxu0 %v227
        %v273 = vpop.f32.mrf.mxu0
        %v274 = vadd.f32 0.0, %v273
        %v275 = vpop.f32.mrf.mxu0
        %v276 = vpop.f32.mrf.mxu0
        %v277 = vadd.f32 0.0, %v276
        %v278 = vpop.f32.mrf.mxu0
        %279 = vmatprep.mubr.bf16.mxu0 0
        %280 = vmatmul.mubr.bf16.gmra.mxu0 %v230
        %v281 = vpop.f32.mrf.mxu0
        %v282 = vadd.f32 0.0, %v281
        %v283 = vpop.f32.mrf.mxu0
        %v284 = vpop.f32.mrf.mxu0
        %v285 = vadd.f32 0.0, %v284
        %v286 = vpop.f32.mrf.mxu0
        %287 = vmatprep.mubr.bf16.mxu0 0
        %288 = vmatmul.mubr.bf16.gmra.mxu0 %v233
        %v289 = vpop.f32.mrf.mxu0
        %v290 = vadd.f32 0.0, %v289
        %v291 = vpop.f32.mrf.mxu0
        %v292 = vpop.f32.mrf.mxu0
        %v293 = vadd.f32 0.0, %v292
        %v294 = vpop.f32.mrf.mxu0
        %295 = vdwg.mxu0
        %296 = vst [vmem:[%s168] sm:$0xff] %v274
        %297 = vst [vmem:[%s168 + $0x8] sm:$0xff] %v277
        %298 = vst [vmem:[%s168 + $0x10] sm:$0xff] %v282
        %299 = vst [vmem:[%s168 + $0x18] sm:$0xff] %v285
        %300 = vst [vmem:[%s168 + $0x20] sm:$0xff] %v290
        %301 = vst [vmem:[%s168 + $0x28] sm:$0xff] %v293
        %v302 = vadd.f32 %v274, %v277
        %v303 = vadd.f32 %v302, %v282
        %v304 = vadd.f32 %v303, %v285
        %v305 = vadd.f32 %v304, %v290
        %v306 = vadd.f32 %v305, %v293
        %v307 = vrot.slane %v306, 4
        %v308 = vadd.f32 %v306, %v307
        %v309 = vrot.slane %v308, 2
        %v310 = vadd.f32 %v308, %v309
        %v311 = vrot.slane %v310, 1
        %v312 = vadd.f32 %v310, %v311
        %313 = vst [vmem:[%s175] sm:$0x1] %v312
        %v314 = vmul.f32 %v274, %v274
        %v315 = vmul.f32 %v277, %v277
        %v316 = vmul.f32 %v282, %v282
        %v317 = vmul.f32 %v285, %v285
        %v318 = vmul.f32 %v290, %v290
        %v319 = vmul.f32 %v293, %v293
        %v320 = vadd.f32 %v314, %v315
        %v321 = vadd.f32 %v320, %v316
        %v322 = vadd.f32 %v321, %v317
        %v323 = vadd.f32 %v322, %v318
        %v324 = vadd.f32 %v323, %v319
        %v325 = vrot.slane %v324, 4
        %v326 = vadd.f32 %v324, %v325
        %v327 = vrot.slane %v326, 2
        %v328 = vadd.f32 %v326, %v327
        %v329 = vrot.slane %v328, 1
        %v330 = vadd.f32 %v328, %v329
        %331 = vst [vmem:[%s175 + $0x1] sm:$0x1] %v330
        %s332 = sand.u32 %s76, 1
        %s333 = scalar_lea.sflag [#allocation3], %s332
        %s334 = sand.u32 %s76, 1
        %s335 = smul.addr %s334, 48
        %s336 = scalar_lea.vmem [#allocation2], %s335
        %s337 = sand.u32 %s102, 1
        %s338 = scalar_lea.sflag [#allocation5], %s337
        %s339 = sand.u32 %s102, 1
        %s340 = smul.addr %s339, 2
        %s341 = scalar_lea.vmem [#allocation4], %s340
        // Predicated region
        $region29: #{tpu_custom_call.1} parent=27 // pred_check
          %p342 = pneg %p86
        $region30: #{tpu_custom_call.1} parent=27 // pred_check_branch
          %344 = sbr.rel (%p342) target = $region32
        $region31: #{tpu_custom_call.1} parent=27 // pred_region
          %s345 = smul.u32 6, %s21
          %s347 = ssub.s32 768, 768
          %348 = vsyncadd %s333, %s347
          %s349 = smul.addr %s345, 128
          %s350 = scalar_lea.hbm %s2, %s349
          %s351 = sshll.u32 %s336, 4
          %s352 = int_to_ptr.vmem [resolvable:$true] %s351
          %357 = dma.vmem_to_hbm [thread:$0]  %s352, 768, %s350, %s333, 128, 128, 8
        $region32: #{tpu_custom_call.1} parent=27 // pred_fallthru
          _
        // Predicated region
        $region33: #{tpu_custom_call.1} parent=27 // pred_check
          %p358 = pneg %p112
        $region34: #{tpu_custom_call.1} parent=27 // pred_check_branch
          %360 = sbr.rel (%p358) target = $region36
        $region35: #{tpu_custom_call.1} parent=27 // pred_region
          %s362 = ssub.s32 32, 32
          %363 = vsyncadd %s338, %s362
          %s364 = smul.addr %s21, 32
          %s365 = scalar_lea.hbm %s3, %s364
          %s367 = sshll.u32 %s341, 4
          %s368 = int_to_ptr.vmem [resolvable:$true] %s367
          %370 = dma.vmem_to_hbm [thread:$0]  %s368, 32, %s365, %s338
        $region36: #{tpu_custom_call.1} parent=27 // pred_fallthru
          _
      $region28: #{tpu_custom_call.1} parent=5 // pred_fallthru
        _
      %p371 = scmp.le.s32.totalorder 2, %s16
      // Predicated region
      $region37: #{tpu_custom_call.1} parent=5 // pred_check
        %p372 = pneg %p371
      $region38: #{tpu_custom_call.1} parent=5 // pred_check_branch
        %374 = sbr.rel (%p372) target = $region40
      $region39: #{tpu_custom_call.1} parent=5 // pred_region
        %s375 = ssub.s32 %s16, 2
        // Predicated region
        $region41: #{tpu_custom_call.1} parent=39 // pred_check
          %p376 = pneg %p92
        $region42: #{tpu_custom_call.1} parent=39 // pred_check_branch
          %378 = sbr.rel (%p376) target = $region44
        $region43: #{tpu_custom_call.1} parent=39 // pred_region
          %s379 = sand.u32 %s77, 1
          %s380 = scalar_lea.sflag [#allocation3], %s379
          %s381 = sand.u32 %s77, 1
          %s382 = smul.addr %s381, 48
          %s383 = scalar_lea.vmem [#allocation2], %s382
          %384 = dma.done %s380, 768
        $region44: #{tpu_custom_call.1} parent=39 // pred_fallthru
          _
        // Predicated region
        $region45: #{tpu_custom_call.1} parent=39 // pred_check
          %p385 = pneg %p118
        $region46: #{tpu_custom_call.1} parent=39 // pred_check_branch
          %387 = sbr.rel (%p385) target = $region48
        $region47: #{tpu_custom_call.1} parent=39 // pred_region
          %s388 = sand.u32 %s103, 1
          %s389 = scalar_lea.sflag [#allocation5], %s388
          %s390 = sand.u32 %s103, 1
          %s391 = smul.addr %s390, 2
          %s392 = scalar_lea.vmem [#allocation4], %s391
          %393 = dma.done %s389, 32
        $region48: #{tpu_custom_call.1} parent=39 // pred_fallthru
          _
      $region40: #{tpu_custom_call.1} parent=5 // pred_fallthru
        _
    $region6: #{tpu_custom_call.1} parent=1 // loop_footer
      %s20 = sadd.s32 1, %s16
    $region7: #{tpu_custom_call.1} parent=1 // loop_footer_branch
      %15 = sbr.rel target = $region3
    $region8: #{tpu_custom_call.1} parent=1 // loop_exit
      _
    %394 = vsyncpa [#allocation3], 1
    %s395 = scalar_lea.sflag [#allocation3], 1
    %396 = vsyncpa %s395, 1
    %397 = vsyncpa [#allocation5], 1
    %s398 = scalar_lea.sflag [#allocation5], 1
    %399 = vsyncpa %s398, 1

</llo_original>
